<compile_context>
chip_gen: v7x
topology: tpu7x:2x2x1
jax: 0.10.0
libtpu: 0.0.40
codegen_flags: <defaults>
</compile_context>

<pallas_src>
import functools
import math

import jax
import jax.numpy as jnp
from jax.experimental import pallas as pl
from jax.experimental.pallas import tpu as pltpu


def _round_up(x, m):
    return ((x + m - 1) // m) * m


def _layernorm_kernel(x_ref, a_ref, b_ref, o_ref, *, eps, features):
    x = x_ref[...].astype(jnp.float32)        # (tile_rows, F)
    a = a_ref[...].astype(jnp.float32)        # (1, F), resident in VMEM
    b = b_ref[...].astype(jnp.float32)        # (1, F), resident in VMEM

    mean = jnp.sum(x, axis=-1, keepdims=True) * (1.0 / features)
    centered = x - mean
    # torch.Tensor.std defaults to the unbiased estimator (divide by N-1).
    var = jnp.sum(centered * centered, axis=-1, keepdims=True) * (
        1.0 / max(features - 1, 1))
    std = jnp.sqrt(var)

    # Per-row reciprocal (tile_rows EUP ops) instead of a full-tile divide.
    # approx=False keeps the 1e-5 tolerance vs. the reference.
    inv = pl.reciprocal(std + eps, approx=False)
    o_ref[...] = (centered * inv * a + b).astype(o_ref.dtype)


def layer_norm(x, a_2, b_2, eps=1e-6, tile_rows=None):
    """x: (..., features); a_2, b_2: (features,). Returns same shape/dtype as x."""
    features = x.shape[-1]
    lead_shape = x.shape[:-1]
    rows = int(math.prod(lead_shape)) if lead_shape else 1
    itemsize = jnp.dtype(x.dtype).itemsize
    param_itemsize = jnp.dtype(a_2.dtype).itemsize

    # Generation-aware VMEM budget (v7x: 64 MiB/TC, v5e/v6e: 128 MiB).
    try:
        vmem_cap = pltpu.get_tpu_info().vmem_capacity_bytes
    except Exception:  # pragma: no cover - conservative fallback
        vmem_cap = 64 * 1024 * 1024
    if vmem_cap > 96 * 1024 * 1024:            # v5e / v6e (128 MiB)
        block_budget = 64 * 1024 * 1024
        vmem_limit_bytes = 100 * 1024 * 1024
    else:                                      # v7x (64 MiB) or unknown
        block_budget = 22 * 1024 * 1024
        vmem_limit_bytes = 56 * 1024 * 1024

    if tile_rows is None:
        # Double-buffered in + out blocks plus ~3 tile-sized f32 temporaries.
        per_row_bytes = features * (4 * itemsize + 12)
        tile_rows = max(8, min(1024, block_budget // max(per_row_bytes, 1)))
        tile_rows = (tile_rows // 8) * 8        # sublane-friendly
        tile_rows = min(tile_rows, _round_up(rows, 8))
        # Guarantee >= 2 grid steps when possible so ("parallel",) shards rows
        # across the two TensorCores on v7x (harmless on single-TC v5e/v6e).
        if tile_rows >= rows and rows > 8:
            tile_rows = _round_up(-(-rows // 2), 8)
    tile_rows = max(8, int(tile_rows))

    # Cheap reshapes only -- no HBM-side padding or trailing slice.
    x2 = x.reshape(rows, features)
    a2 = a_2.reshape(1, features)
    b2 = b_2.reshape(1, features)

    grid = (pl.cdiv(rows, tile_rows),)
    kernel = functools.partial(_layernorm_kernel, eps=eps, features=features)

    cost = pl.CostEstimate(
        flops=8 * rows * features,
        transcendentals=2 * rows,
        bytes_accessed=2 * rows * features * itemsize
        + 2 * features * param_itemsize,
    )

    out = pl.pallas_call(
        kernel,
        out_shape=jax.ShapeDtypeStruct((rows, features), x.dtype),
        grid_spec=pltpu.PrefetchScalarGridSpec(
            num_scalar_prefetch=0,
            grid=grid,
            in_specs=[
                # Ragged last row-block is handled by Pallas (masked store of
                # the valid rows); last dim = full `features` extent, which is
                # legal in a BlockSpec even when features % 128 != 0.
                pl.BlockSpec((tile_rows, features), lambda i: (i, 0)),
                # gamma/beta: whole arrays resident in VMEM, no per-step DMA.
                pl.BlockSpec(memory_space=pltpu.MemorySpace.VMEM),
                pl.BlockSpec(memory_space=pltpu.MemorySpace.VMEM),
            ],
            out_specs=pl.BlockSpec((tile_rows, features), lambda i: (i, 0)),
        ),
        compiler_params=pltpu.CompilerParams(
            dimension_semantics=("parallel",),
            vmem_limit_bytes=vmem_limit_bytes,
        ),
        cost_estimate=cost,
    )(x2, a2, b2)

    return out.reshape(*lead_shape, features)


def _reference_layer_norm(x, a_2, b_2, eps=1e-6):
    xf = x.astype(jnp.float32)
    mean = jnp.mean(xf, axis=-1, keepdims=True)
    centered = xf - mean
    var = jnp.sum(centered * centered, axis=-1, keepdims=True) / (x.shape[-1] - 1)
    std = jnp.sqrt(var)
    return (a_2 * centered / (std + eps) + b_2).astype(x.dtype)


if __name__ == "__main__":
    key = jax.random.PRNGKey(0)
    batch, seq, features = 2, 8, 32

    x = jax.random.normal(key, (batch, seq, features), dtype=jnp.float32)
    # Deterministic parameter init, matching nn.Parameter(torch.ones/zeros(features)).
    a_2 = jnp.ones((features,), dtype=jnp.float32)
    b_2 = jnp.zeros((features,), dtype=jnp.float32)

    out = layer_norm(x, a_2, b_2, eps=1e-6)
    out = jax.block_until_ready(out)

    ref = _reference_layer_norm(x, a_2, b_2, eps=1e-6)
    assert out.shape == x.shape and out.dtype == x.dtype
    assert jnp.max(jnp.abs(out - ref)) < 1e-5, "mismatch vs reference"

    print("KERNEL_OK")
</pallas_src>

<mosaic_0001>
module attributes {stable_mosaic.version = 11 : i64} {
  func.func @_layernorm_kernel(%arg0: i32, %arg1: memref<8x32xf32, #tpu.memory_space<vmem>>, %arg2: memref<1x32xf32, #tpu.memory_space<vmem>>, %arg3: memref<1x32xf32, #tpu.memory_space<vmem>>, %arg4: memref<8x32xf32, #tpu.memory_space<vmem>>) attributes {dimension_semantics = [#tpu.dimension_semantics<parallel>], iteration_bounds = array<i64: 2>, scalar_prefetch = 0 : i64, scratch_operands = 0 : i64, tpu.core_type = #tpu.core_type<tc>, window_params = [{transform_indices = @transform_0, window_bounds = array<i64: 8, 32>}, {pipeline_mode = #tpu.pipeline_mode<synchronous>, transform_indices = @transform_1, window_bounds = array<i64: 1, 32>}, {pipeline_mode = #tpu.pipeline_mode<synchronous>, transform_indices = @transform_2, window_bounds = array<i64: 1, 32>}, {transform_indices = @transform_3, window_bounds = array<i64: 8, 32>}]} {
    %c0 = arith.constant 0 : index
    %c0_0 = arith.constant 0 : index
    %0 = vector.load %arg1[%c0, %c0_0] : memref<8x32xf32, #tpu.memory_space<vmem>>, vector<8x32xf32>
    %c0_1 = arith.constant 0 : index
    %c0_2 = arith.constant 0 : index
    %1 = vector.load %arg2[%c0_1, %c0_2] : memref<1x32xf32, #tpu.memory_space<vmem>>, vector<1x32xf32>
    %c0_3 = arith.constant 0 : index
    %c0_4 = arith.constant 0 : index
    %2 = vector.load %arg3[%c0_3, %c0_4] : memref<1x32xf32, #tpu.memory_space<vmem>>, vector<1x32xf32>
    %cst = arith.constant dense<0.000000e+00> : vector<8xf32>
    %3 = vector.multi_reduction <add>, %0, %cst [1] : vector<8x32xf32> to vector<8xf32>
    %4 = vector.shape_cast %3 : vector<8xf32> to vector<8x1xf32>
    %cst_5 = arith.constant 3.125000e-02 : f32
    %5 = vector.broadcast %cst_5 : f32 to vector<8x1xf32>
    %6 = arith.mulf %4, %5 : vector<8x1xf32>
    %7 = vector.broadcast %6 : vector<8x1xf32> to vector<8x32xf32>
    %8 = arith.subf %0, %7 : vector<8x32xf32>
    %9 = arith.mulf %8, %8 : vector<8x32xf32>
    %cst_6 = arith.constant dense<0.000000e+00> : vector<8xf32>
    %10 = vector.multi_reduction <add>, %9, %cst_6 [1] : vector<8x32xf32> to vector<8xf32>
    %11 = vector.shape_cast %10 : vector<8xf32> to vector<8x1xf32>
    %cst_7 = arith.constant 0.0322580636 : f32
    %12 = vector.broadcast %cst_7 : f32 to vector<8x1xf32>
    %13 = arith.mulf %11, %12 : vector<8x1xf32>
    %14 = math.sqrt %13 : vector<8x1xf32>
    %cst_8 = arith.constant 9.99999997E-7 : f32
    %15 = vector.broadcast %cst_8 : f32 to vector<8x1xf32>
    %16 = arith.addf %14, %15 : vector<8x1xf32>
    %17 = tpu.reciprocal %16 : vector<8x1xf32> -> vector<8x1xf32>
    %18 = vector.broadcast %17 : vector<8x1xf32> to vector<8x32xf32>
    %19 = arith.mulf %8, %18 : vector<8x32xf32>
    %20 = vector.broadcast %1 : vector<1x32xf32> to vector<8x32xf32>
    %21 = arith.mulf %19, %20 : vector<8x32xf32>
    %22 = vector.broadcast %2 : vector<1x32xf32> to vector<8x32xf32>
    %23 = arith.addf %21, %22 : vector<8x32xf32>
    %c0_9 = arith.constant 0 : index
    %c0_10 = arith.constant 0 : index
    %24 = vector.load %arg4[%c0_9, %c0_10] : memref<8x32xf32, #tpu.memory_space<vmem>>, vector<8x32xf32>
    tpu.vector_store %arg4[%c0_9, %c0_10], %23 {strides = array<i32>} : memref<8x32xf32, #tpu.memory_space<vmem>>, vector<8x32xf32>,
    return
  }
  func.func @transform_0(%arg0: i32) -> (i32, i32) {
    %c0_i32 = arith.constant 0 : i32
    %c0_i32_0 = arith.constant 0 : i32
    return %arg0, %c0_i32 : i32, i32
  }
  func.func @transform_1(%arg0: i32) -> (i32, i32) {
    %c0_i32 = arith.constant 0 : i32
    %c0_i32_0 = arith.constant 0 : i32
    %c0_i32_1 = arith.constant 0 : i32
    return %c0_i32, %c0_i32_0 : i32, i32
  }
  func.func @transform_2(%arg0: i32) -> (i32, i32) {
    %c0_i32 = arith.constant 0 : i32
    %c0_i32_0 = arith.constant 0 : i32
    %c0_i32_1 = arith.constant 0 : i32
    return %c0_i32, %c0_i32_0 : i32, i32
  }
  func.func @transform_3(%arg0: i32) -> (i32, i32) {
    %c0_i32 = arith.constant 0 : i32
    %c0_i32_0 = arith.constant 0 : i32
    return %arg0, %c0_i32 : i32, i32
  }
}

</mosaic_0001>

<llo_original>
// kernel: tpu_custom_call.1
$region0: #{tpu_custom_call.1}
  #allocation0 [shape = 'u32[]', space=smem, size = 0x4, offset = 0x4, fixed_abs, tag = 'smem constant byte address 0x4 - core index']
  #allocation1 [shape = 'u32[144,128]{1,0:T(1,128)}', space=vmem, size = 0x12000, scoped, tag = 'internal scratch']
  %s0 = inlined_call_operand.hbm [shape: f32[16,32], index: 0, kind: input, shape index: {}]
  %s1 = inlined_call_operand.vmem [shape: f32[1,32], index: 1, kind: input, shape index: {}]
  %s2 = inlined_call_operand.vmem [shape: f32[1,32], index: 2, kind: input, shape index: {}]
  %s3 = inlined_call_operand.hbm [shape: f32[16,32], index: 3, kind: output, shape index: {}]
  %s4 = sld [smem:[#allocation0]]
  $region49: #{tpu_custom_call.1} parent=0
    _
  %s6 = ssub.s32 1, %s4
  %s7 = scalar_select 0, %s6, %s4
  $region1: #{tpu_custom_call.1} parent=0
    #allocation2 [shape = 'u8[8192]{0}', space=vmem, size = 0x2000, scoped, tag = 'input window, operand 0']
    #allocation3 [shape = 's32[2]{0}', space=sflag, size = 0x8, scoped, tag = 'scoped memory for tpu_custom_call.1']
    #allocation4 [shape = 's32[2]{0}', space=sflag, size = 0x8, scoped, tag = 'scoped memory for tpu_custom_call.1']
    #allocation5 [shape = 'u8[8192]{0}', space=vmem, size = 0x2000, scoped, tag = 'output window, operand 0']
    %8 = vsyncpa [#allocation3], 0
    %s9 = scalar_lea.sflag [#allocation3], 1
    %10 = vsyncpa %s9, 0
    %11 = vsyncpa [#allocation4], 0
    %s12 = scalar_lea.sflag [#allocation4], 1
    %13 = vsyncpa %s12, 0
    loop: start=0, step=1, limit=4
    $region2: #{tpu_custom_call.1} parent=1 // loop_pre_header
      _
    $region3: #{tpu_custom_call.1} parent=1 // loop_header
      %s15 = sphi 0, %s19
      %p16 = scmp.ge.s32.totalorder %s15, 4
      %s25 = sphi 0, %s27
      %s28 = sphi 0, %s25
      %s29 = sphi 0, %s28
      %s45 = sphi 0, %s29
      %s49 = sphi 0, %s49
      %s51 = sphi 0, %s49
      %s52 = sphi 0, %s51
      %s66 = sphi 0, %s52
      %s70 = sphi 0, %s70
      %s72 = sphi 0, %s70
      %s73 = sphi 0, %s72
      %s87 = sphi 0, %s73
      %s93 = sphi 0, %s95
      %s96 = sphi 0, %s93
      %s97 = sphi 0, %s96
      %s113 = sphi 0, %s97
    $region4: #{tpu_custom_call.1} parent=1 // loop_header_branch
      %18 = sbr.rel (%p16) target = $region8
    $region5: #{tpu_custom_call.1} parent=1 // loop_body
      %s20 = ssub.s32 %s15, 1
      %s21 = ssub.s32 %s15, 2
      %s22 = sadd.s32 %s15, 1
      %s23 = ssub.s32 %s15, %s22
      %p24 = scmp.eq.s32.totalorder %s23, 0
      %s26 = sadd.s32 %s25, 1
      %s27 = scalar_select %p24, %s25, %s26
      %p30 = pneg %p24
      %p31 = scmp.eq.s32.totalorder %s15, 1
      %p32 = por %p30, %p31
      %p33 = scmp.ne.s32.totalorder %s25, %s28
      %p34 = scmp.eq.s32.totalorder %s15, 0
      %p35 = por %p33, %p34
      %p36 = scmp.ne.s32.totalorder %s25, %s28
      %p37 = scmp.eq.s32.totalorder %s20, 1
      %p38 = por %p36, %p37
      %p39 = scmp.ne.s32.totalorder %s28, %s29
      %p40 = scmp.eq.s32.totalorder %s20, 0
      %p41 = por %p39, %p40
      %p42 = scmp.ne.s32.totalorder %s28, %s29
      %p43 = scmp.eq.s32.totalorder %s21, 1
      %p44 = por %p42, %p43
      %p46 = scmp.ne.s32.totalorder %s29, %s45
      %p47 = scmp.eq.s32.totalorder %s21, 0
      %p48 = por %p46, %p47
      %s50 = sadd.s32 %s49, 1
      %p53 = scmp.eq.s32.totalorder %s15, 1
      %p54 = scmp.ne.s32.totalorder %s49, %s51
      %p55 = scmp.eq.s32.totalorder %s15, 0
      %p56 = por %p54, %p55
      %p57 = scmp.ne.s32.totalorder %s49, %s51
      %p58 = scmp.eq.s32.totalorder %s20, 1
      %p59 = por %p57, %p58
      %p60 = scmp.ne.s32.totalorder %s51, %s52
      %p61 = scmp.eq.s32.totalorder %s20, 0
      %p62 = por %p60, %p61
      %p63 = scmp.ne.s32.totalorder %s51, %s52
      %p64 = scmp.eq.s32.totalorder %s21, 1
      %p65 = por %p63, %p64
      %p67 = scmp.ne.s32.totalorder %s52, %s66
      %p68 = scmp.eq.s32.totalorder %s21, 0
      %p69 = por %p67, %p68
      %s71 = sadd.s32 %s70, 1
      %p74 = scmp.eq.s32.totalorder %s15, 1
      %p75 = scmp.ne.s32.totalorder %s70, %s72
      %p76 = scmp.eq.s32.totalorder %s15, 0
      %p77 = por %p75, %p76
      %p78 = scmp.ne.s32.totalorder %s70, %s72
      %p79 = scmp.eq.s32.totalorder %s20, 1
      %p80 = por %p78, %p79
      %p81 = scmp.ne.s32.totalorder %s72, %s73
      %p82 = scmp.eq.s32.totalorder %s20, 0
      %p83 = por %p81, %p82
      %p84 = scmp.ne.s32.totalorder %s72, %s73
      %p85 = scmp.eq.s32.totalorder %s21, 1
      %p86 = por %p84, %p85
      %p88 = scmp.ne.s32.totalorder %s73, %s87
      %p89 = scmp.eq.s32.totalorder %s21, 0
      %p90 = por %p88, %p89
      %s91 = ssub.s32 %s15, %s22
      %p92 = scmp.eq.s32.totalorder %s91, 0
      %s94 = sadd.s32 %s93, 1
      %s95 = scalar_select %p92, %s93, %s94
      %p98 = pneg %p92
      %p99 = scmp.eq.s32.totalorder %s15, 1
      %p100 = por %p98, %p99
      %p101 = scmp.ne.s32.totalorder %s93, %s96
      %p102 = scmp.eq.s32.totalorder %s15, 0
      %p103 = por %p101, %p102
      %p104 = scmp.ne.s32.totalorder %s93, %s96
      %p105 = scmp.eq.s32.totalorder %s20, 1
      %p106 = por %p104, %p105
      %p107 = scmp.ne.s32.totalorder %s96, %s97
      %p108 = scmp.eq.s32.totalorder %s20, 0
      %p109 = por %p107, %p108
      %p110 = scmp.ne.s32.totalorder %s96, %s97
      %p111 = scmp.eq.s32.totalorder %s21, 1
      %p112 = por %p110, %p111
      %p114 = scmp.ne.s32.totalorder %s97, %s113
      %p115 = scmp.eq.s32.totalorder %s21, 0
      %p116 = por %p114, %p115
      %p117 = scmp.le.s32.totalorder 1, %s15
      %p118 = scmp.lt.s32.totalorder %s15, 3
      %p119 = pnand %p117, %p118
      %p120 = pneg %p119
      // Predicated region
      $region9: #{tpu_custom_call.1} parent=5 // pred_check
        _
      $region10: #{tpu_custom_call.1} parent=5 // pred_check_branch
        %122 = sbr.rel (%p119) target = $region12
      $region11: #{tpu_custom_call.1} parent=5 // pred_region
        %s123 = ssub.s32 %s15, 1
        // Predicated region
        $region13: #{tpu_custom_call.1} parent=11 // pred_check
          %p124 = pneg %p62
        $region14: #{tpu_custom_call.1} parent=11 // pred_check_branch
          %126 = sbr.rel (%p124) target = $region16
        $region15: #{tpu_custom_call.1} parent=11 // pred_region
          _
        $region16: #{tpu_custom_call.1} parent=11 // pred_fallthru
          _
        // Predicated region
        $region17: #{tpu_custom_call.1} parent=11 // pred_check
          %p127 = pneg %p83
        $region18: #{tpu_custom_call.1} parent=11 // pred_check_branch
          %129 = sbr.rel (%p127) target = $region20
        $region19: #{tpu_custom_call.1} parent=11 // pred_region
          _
        $region20: #{tpu_custom_call.1} parent=11 // pred_fallthru
          _
      $region12: #{tpu_custom_call.1} parent=5 // pred_fallthru
        _
      %p130 = scmp.lt.s32.totalorder %s15, 2
      // Predicated region
      $region21: #{tpu_custom_call.1} parent=5 // pred_check
        %p131 = pneg %p130
      $region22: #{tpu_custom_call.1} parent=5 // pred_check_branch
        %133 = sbr.rel (%p131) target = $region24
      $region23: #{tpu_custom_call.1} parent=5 // pred_region
        // Predicated region
        $region25: #{tpu_custom_call.1} parent=23 // pred_check
          %p134 = pneg %p35
        $region26: #{tpu_custom_call.1} parent=23 // pred_check_branch
          %136 = sbr.rel (%p134) target = $region28
        $region27: #{tpu_custom_call.1} parent=23 // pred_region
          %s137 = sand.u32 %s25, 1
          %s138 = scalar_lea.sflag [#allocation3], %s137
          %s139 = sand.u32 %s25, 1
          %s140 = smul.addr %s139, 8
          %s141 = scalar_lea.vmem [#allocation2], %s140
          %s143 = ssub.s32 128, 128
          %144 = vsyncadd %s138, %s143
          %s145 = smul.addr %s15, 128
          %s146 = scalar_lea.hbm %s0, %s145
          %s148 = sshll.u32 %s141, 4
          %s149 = int_to_ptr.vmem [resolvable:$true] %s148
          %151 = dma.hbm_to_vmem [thread:$0]  %s146, 128, %s149, %s138
        $region28: #{tpu_custom_call.1} parent=23 // pred_fallthru
          _
      $region24: #{tpu_custom_call.1} parent=5 // pred_fallthru
        _
      %p152 = scmp.le.s32.totalorder 1, %s15
      %p153 = scmp.lt.s32.totalorder %s15, 3
      %p154 = pnand %p152, %p153
      %p155 = pneg %p154
      // Predicated region
      $region29: #{tpu_custom_call.1} parent=5 // pred_check
        _
      $region30: #{tpu_custom_call.1} parent=5 // pred_check_branch
        %157 = sbr.rel (%p154) target = $region32
      $region31: #{tpu_custom_call.1} parent=5 // pred_region
        %s158 = ssub.s32 %s15, 1
        %s159 = sand.u32 %s28, 1
        %s160 = scalar_lea.sflag [#allocation3], %s159
        %s161 = sand.u32 %s28, 1
        %s162 = smul.addr %s161, 8
        %s163 = scalar_lea.vmem [#allocation2], %s162
        // Predicated region
        $region33: #{tpu_custom_call.1} parent=31 // pred_check
          %p164 = pneg %p41
        $region34: #{tpu_custom_call.1} parent=31 // pred_check_branch
          %166 = sbr.rel (%p164) target = $region36
        $region35: #{tpu_custom_call.1} parent=31 // pred_region
          %167 = dma.done %s160, 128
        $region36: #{tpu_custom_call.1} parent=31 // pred_fallthru
          _
        %s168 = sand.u32 %s28, 1
        %s169 = scalar_lea.sflag [#allocation3], %s168
        %s170 = sand.u32 %s28, 1
        %s171 = smul.addr %s170, 8
        %s172 = scalar_lea.vmem [#allocation2], %s171
        %p173 = pneg %p41
        %p174 = pneg %p38
        %p175 = pneg %p62
        %p176 = pneg %p59
        %p177 = pneg %p83
        %p178 = pneg %p80
        %p179 = pneg %p109
        %p180 = pneg %p106
        %s181 = sand.u32 %s96, 1
        %s182 = scalar_lea.sflag [#allocation4], %s181
        %s183 = sand.u32 %s96, 1
        %s184 = smul.addr %s183, 8
        %s185 = scalar_lea.vmem [#allocation5], %s184
        %v186 = vld [vmem:[%s163] sm:$0xff]
        %v187 = vld [vmem:[%s1] sm:$0x1]
        %v188 = vld [vmem:[%s2] sm:$0x1]
        %vm189 = vcmask 261120
        %v190 = vsel %vm189, %v186, 0.0
        %191 = vadd.xlane.f32.xlu0 %v190
        %v192 = vpop.xlane.xlu0 %191
        %v193 = vmul.f32 %v192, 0.03125
        %v194 = vsub.f32 %v186, %v193
        %v195 = vmul.f32 %v194, %v194
        %v196 = vsel %vm189, %v195, 0.0
        %197 = vadd.xlane.f32.xlu0 %v196
        %v198 = vpop.xlane.xlu0 %197
        %v199 = vmul.f32 %v198, 0.032258064
        %v200 = vrsqrt.pop %v199
        %v201 = vmul.f32 %v199, %v200
        %vm202 = vcmp.eq.f32.partialorder %v199, inf
        %v203 = vsel %vm202, %v199, %v201
        %vm204 = vcmp.eq.f32.partialorder %v199, 0.0
        %v205 = vand.u32 %v199, 2147483648
        %v206 = vsel %vm204, %v205, %v203
        %v207 = vadd.f32 %v206, 1e-06
        %v208 = vrcp.pop %v207
        %v209 = vmul.f32 %v194, %v208
        %v211 = vlaneseq
        %v212 = vshrl.u32 %v211, 7
        %v213 = vsub.s32 0, %v212
        %v214 = vrot.slane %v187, %v213
        %v216 = vmul.f32 %v209, %v214
        %v218 = vlaneseq
        %v219 = vshrl.u32 %v218, 7
        %v220 = vsub.s32 0, %v219
        %v221 = vrot.slane %v188, %v220
        %v223 = vadd.f32 %v216, %v221
        %224 = vst.msk [vmem:[%s185] sm:$0xff] %vm189, %v223
        %s225 = sand.u32 %s96, 1
        %s226 = scalar_lea.sflag [#allocation4], %s225
        %s227 = sand.u32 %s96, 1
        %s228 = smul.addr %s227, 8
        %s229 = scalar_lea.vmem [#allocation5], %s228
        // Predicated region
        $region37: #{tpu_custom_call.1} parent=31 // pred_check
          %p230 = pneg %p106
        $region38: #{tpu_custom_call.1} parent=31 // pred_check_branch
          %232 = sbr.rel (%p230) target = $region40
        $region39: #{tpu_custom_call.1} parent=31 // pred_region
          %s234 = ssub.s32 128, 128
          %235 = vsyncadd %s226, %s234
          %s236 = smul.addr %s20, 128
          %s237 = scalar_lea.hbm %s3, %s236
          %s239 = sshll.u32 %s229, 4
          %s240 = int_to_ptr.vmem [resolvable:$true] %s239
          %242 = dma.vmem_to_hbm [thread:$0]  %s240, 128, %s237, %s226
        $region40: #{tpu_custom_call.1} parent=31 // pred_fallthru
          _
      $region32: #{tpu_custom_call.1} parent=5 // pred_fallthru
        _
      %p243 = scmp.le.s32.totalorder 2, %s15
      // Predicated region
      $region41: #{tpu_custom_call.1} parent=5 // pred_check
        %p244 = pneg %p243
      $region42: #{tpu_custom_call.1} parent=5 // pred_check_branch
        %246 = sbr.rel (%p244) target = $region44
      $region43: #{tpu_custom_call.1} parent=5 // pred_region
        %s247 = ssub.s32 %s15, 2
        // Predicated region
        $region45: #{tpu_custom_call.1} parent=43 // pred_check
          %p248 = pneg %p112
        $region46: #{tpu_custom_call.1} parent=43 // pred_check_branch
          %250 = sbr.rel (%p248) target = $region48
        $region47: #{tpu_custom_call.1} parent=43 // pred_region
          %s251 = sand.u32 %s97, 1
          %s252 = scalar_lea.sflag [#allocation4], %s251
          %s253 = sand.u32 %s97, 1
          %s254 = smul.addr %s253, 8
          %s255 = scalar_lea.vmem [#allocation5], %s254
          %256 = dma.done %s252, 128
        $region48: #{tpu_custom_call.1} parent=43 // pred_fallthru
          _
      $region44: #{tpu_custom_call.1} parent=5 // pred_fallthru
        _
    $region6: #{tpu_custom_call.1} parent=1 // loop_footer
      %s19 = sadd.s32 1, %s15
    $region7: #{tpu_custom_call.1} parent=1 // loop_footer_branch
      %14 = sbr.rel target = $region3
    $region8: #{tpu_custom_call.1} parent=1 // loop_exit
      _
    %257 = vsyncpa [#allocation3], 1
    %s258 = scalar_lea.sflag [#allocation3], 1
    %259 = vsyncpa %s258, 1
    %260 = vsyncpa [#allocation4], 1
    %s261 = scalar_lea.sflag [#allocation4], 1
    %262 = vsyncpa %s261, 1

</llo_original>
